<compile_context>
chip_gen: v7x
topology: tpu7x:2x2x1
jax: 0.10.0
libtpu: 0.0.40
codegen_flags: <defaults>
</compile_context>

<pallas_src>
import functools

import jax
import jax.numpy as jnp
from jax import lax
from jax.experimental import pallas as pl
from jax.experimental.pallas import tpu as pltpu

KERNEL_SIZE = 7  # odd kernel; padding = KERNEL_SIZE // 2 keeps H, W unchanged


def _conv_to_matmul_weights(conv_w, H, W, C, hw_out):
    """Repack (1, 2, K, K) conv weights into a (2*H*W, hw_out) matrix A so that
    concat([sum_flat, max_flat], -1) @ A == Conv2d(2->1, K, pad=K//2, bias=False)
    applied to the stacked [mean, max] maps.  Zero padding of the conv and the
    1/C of the channel mean are folded into A; output columns are zero-padded
    to hw_out (a multiple of the spatial tile)."""
    K = conv_w.shape[-1]
    P = K // 2
    HW = H * W
    w_flat = conv_w.reshape(2, K * K).astype(jnp.float32)
    pos = jnp.arange(HW)
    h_in, w_in = pos // W, pos % W            # input pixel coords  (rows of A)
    h_out, w_out = pos // W, pos % W          # output pixel coords (cols of A)
    dy = h_in[:, None] - h_out[None, :] + P   # (HW_in, HW_out) tap row offset
    dx = w_in[:, None] - w_out[None, :] + P   # (HW_in, HW_out) tap col offset
    valid = (dy >= 0) & (dy < K) & (dx >= 0) & (dx < K)
    tap = jnp.where(valid, dy * K + dx, 0)
    A = jnp.where(valid[None, :, :], w_flat[:, tap], 0.0)   # (2, HW, HW)
    A = A.at[0].multiply(1.0 / C)             # fold 1/C: kernel computes a SUM
    A = A.reshape(2 * HW, HW)
    if hw_out > HW:
        A = jnp.pad(A, ((0, 0), (0, hw_out - HW)))
    return A


def _spatial_attention_kernel(x_ref, a_ref, o_ref, sum_sc, max_sc, *, hw):
    # x_ref : (block_n, c_tile, HW)   lane-dense input block
    # a_ref : (2*HW, hw_tile)         conv-as-matmul weights (this spatial tile)
    # o_ref : (block_n, hw_tile)      lane-dense output tile
    # sum_sc/max_sc : (block_n, HW)   f32 running channel sum / max
    c = pl.program_id(2)

    @pl.when(c == 0)
    def _():
        sum_sc[...] = jnp.zeros_like(sum_sc)
        max_sc[...] = jnp.full_like(max_sc, -jnp.inf)

    x = x_ref[...]
    # f32 accumulation of the channel reduction (works for bf16 x inputs too).
    sum_sc[...] += jnp.sum(x.astype(jnp.float32), axis=1)
    max_sc[...] = jnp.maximum(max_sc[...], jnp.max(x, axis=1).astype(jnp.float32))

    @pl.when(c == pl.num_programs(2) - 1)
    def _():
        # Whole KxK conv as two MXU matmuls on static views of A (no lane-dim
        # concat, no extra buffer).  1/C is already folded into a_ref[:hw].
        acc = jnp.dot(sum_sc[...], a_ref[0:hw, :],
                      preferred_element_type=jnp.float32)
        acc = acc + jnp.dot(max_sc[...], a_ref[hw:2 * hw, :],
                            preferred_element_type=jnp.float32)
        o_ref[...] = jax.nn.sigmoid(acc).astype(o_ref.dtype)


def spatial_attention(x, conv_w):
    """x: (N, C, H, W) f32/bf16, conv_w: (1, 2, K, K) f32 -> (N, 1, H, W)."""
    N, C, H, W = x.shape
    HW = H * W
    x_flat = x.reshape(N, C, HW)                  # layout plumbing only
    x_bytes = jnp.dtype(x.dtype).itemsize

    # ---- per-generation VMEM budget (v7x: 64 MiB phys -> ~48 MiB budget,
    #      v5e/v6e: 128 MiB -> ~96 MiB budget; fall back conservatively). ----
    try:
        vmem_cap = int(pltpu.get_tpu_info().vmem_capacity_bytes)
    except Exception:
        vmem_cap = 64 * 1024 * 1024
    budget = (vmem_cap * 3) // 4                  # headroom for compiler scratch

    # ---- spatial (lane) tile: multiple of 128, A tile (double-buffered)
    #      capped at ~1/3 of the budget; pad output columns if HW not divisible.
    a_col_bytes = 2 * HW * 4                      # one f32 output column of A
    max_hw_tile = max(128, ((budget // 3) // (2 * a_col_bytes)) // 128 * 128)
    hw_pad = -(-HW // 128) * 128
    hw_tile = min(hw_pad, max_hw_tile, 2048)
    hw_out = -(-HW // hw_tile) * hw_tile          # padded output width
    num_s = hw_out // hw_tile

    A = _conv_to_matmul_weights(conv_w, H, W, C, hw_out)

    fixed_bytes = 2 * (2 * HW) * hw_tile * 4      # A, double-buffered

    # ---- batch block: guarantee >=2 independent steps on the parallel batch
    #      axis when N is large enough (v7x has 2 TensorCores). ----
    bn_cap = N // 2 if N >= 16 else N
    bn_cands = [c for c in (256, 128, 64, 32, 16, 8) if c <= bn_cap and N % c == 0]
    bn_cands = bn_cands or [N]
    # ---- channel tile: full C, or a sublane-aligned divisor of C. ----
    ct_cands = [C] + [c for c in (512, 256, 128, 64, 32, 16, 8)
                      if c < C and C % c == 0]

    def fits(bn, ct):
        x_blk = 2 * bn * ct * HW * x_bytes        # double-buffered input block
        out_blk = 2 * bn * hw_tile * 4            # double-buffered output tile
        scratch = 2 * bn * HW * 4                 # sum + max accumulators
        return fixed_bytes + x_blk + out_blk + scratch <= budget

    block_n, c_tile = bn_cands[-1], ct_cands[-1]
    chosen = False
    for bn in bn_cands:
        for ct in ct_cands:
            if fits(bn, ct):
                block_n, c_tile = bn, ct
                chosen = True
                break
        if chosen:
            break

    grid = (N // block_n, num_s, C // c_tile)

    out_flat = pl.pallas_call(
        functools.partial(_spatial_attention_kernel, hw=HW),
        out_shape=jax.ShapeDtypeStruct((N, hw_out), jnp.float32),
        grid=grid,
        in_specs=[
            # x block depends on (batch, channel) only; resident across the
            # spatial-tile axis within one channel step.
            pl.BlockSpec((block_n, c_tile, HW), lambda b, s, c: (b, c, 0)),
            pl.BlockSpec((2 * HW, hw_tile), lambda b, s, c: (0, s)),
        ],
        out_specs=pl.BlockSpec((block_n, hw_tile), lambda b, s, c: (b, s)),
        scratch_shapes=[
            pltpu.VMEM((block_n, HW), jnp.float32),   # running channel sum
            pltpu.VMEM((block_n, HW), jnp.float32),   # running channel max
        ],
        compiler_params=pltpu.CompilerParams(
            # Only the batch axis is parallel (megacore); sharding the spatial
            # axis would re-DMA the dominant x block on both cores.
            dimension_semantics=("parallel", "arbitrary", "arbitrary"),
            vmem_limit_bytes=budget,
        ),
    )(x_flat, A)

    return out_flat[:, :HW].reshape(N, 1, H, W)


def _reference(x, conv_w):
    avg = jnp.mean(x, axis=1, keepdims=True)
    mx = jnp.max(x, axis=1, keepdims=True)
    feat = jnp.concatenate([avg, mx], axis=1)
    pad = KERNEL_SIZE // 2
    out = lax.conv_general_dilated(
        feat, conv_w, window_strides=(1, 1),
        padding=[(pad, pad), (pad, pad)],
        dimension_numbers=("NCHW", "OIHW", "NCHW"),
        precision=lax.Precision.HIGHEST)
    return jax.nn.sigmoid(out)


if __name__ == "__main__":
    key = jax.random.PRNGKey(0)
    kx, kw = jax.random.split(key)

    # Small shapes consistent with the module: batch=2, channels=4, spatial=16.
    x = jax.random.normal(kx, (2, 4, 16, 16), dtype=jnp.float32)

    # Deterministic weight init mimicking PyTorch Conv2d default (kaiming-uniform bound).
    K = KERNEL_SIZE
    fan_in = 2 * K * K
    bound = (1.0 / fan_in) ** 0.5
    conv_w = jax.random.uniform(kw, (1, 2, K, K), jnp.float32, -bound, bound)

    out = spatial_attention(x, conv_w)
    out = jax.block_until_ready(out)

    ref = _reference(x, conv_w)
    assert out.shape == (2, 1, 16, 16), out.shape
    # Default MXU precision (no Precision.HIGHEST) -> slightly looser tolerance.
    assert jnp.allclose(out, ref, atol=1e-2, rtol=1e-2), "mismatch vs JAX reference"
    print("KERNEL_OK")
</pallas_src>

<mosaic_0001>
module attributes {stable_mosaic.version = 11 : i64} {
  func.func @_spatial_attention_kernel(%arg0: i32, %arg1: i32, %arg2: i32, %arg3: memref<2x4x256xf32, #tpu.memory_space<vmem>>, %arg4: memref<512x256xf32, #tpu.memory_space<vmem>>, %arg5: memref<2x256xf32, #tpu.memory_space<vmem>>, %arg6: memref<2x256xf32, #tpu.memory_space<vmem>>, %arg7: memref<2x256xf32, #tpu.memory_space<vmem>>) attributes {dimension_semantics = [#tpu.dimension_semantics<parallel>, #tpu.dimension_semantics<arbitrary>, #tpu.dimension_semantics<arbitrary>], iteration_bounds = array<i64: 1, 1, 1>, scalar_prefetch = 0 : i64, scratch_operands = 2 : i64, tpu.core_type = #tpu.core_type<tc>, window_params = [{transform_indices = @transform_0, window_bounds = array<i64: 2, 4, 256>}, {transform_indices = @transform_1, window_bounds = array<i64: 512, 256>}, {transform_indices = @transform_2, window_bounds = array<i64: 2, 256>}]} {
    %c0_i32 = arith.constant 0 : i32
    %0 = arith.cmpi eq, %arg2, %c0_i32 : i32
    %1 = arith.extui %0 : i1 to i32
    %c0_i32_0 = arith.constant 0 : i32
    %2 = arith.cmpi ne, %1, %c0_i32_0 : i32
    scf.if %2 {
      %cst_14 = arith.constant 0.000000e+00 : f32
      %15 = vector.broadcast %cst_14 : f32 to vector<2x256xf32>
      %c0_15 = arith.constant 0 : index
      %c0_16 = arith.constant 0 : index
      %16 = vector.load %arg6[%c0_15, %c0_16] : memref<2x256xf32, #tpu.memory_space<vmem>>, vector<2x256xf32>
      tpu.vector_store %arg6[%c0_15, %c0_16], %15 {strides = array<i32>} : memref<2x256xf32, #tpu.memory_space<vmem>>, vector<2x256xf32>,
      %cst_17 = arith.constant 0xFF800000 : f32
      %17 = vector.broadcast %cst_17 : f32 to vector<2x256xf32>
      %c0_18 = arith.constant 0 : index
      %c0_19 = arith.constant 0 : index
      %18 = vector.load %arg7[%c0_18, %c0_19] : memref<2x256xf32, #tpu.memory_space<vmem>>, vector<2x256xf32>
      tpu.vector_store %arg7[%c0_18, %c0_19], %17 {strides = array<i32>} : memref<2x256xf32, #tpu.memory_space<vmem>>, vector<2x256xf32>,
    } else {
    }
    %c0 = arith.constant 0 : index
    %c0_1 = arith.constant 0 : index
    %c0_2 = arith.constant 0 : index
    %3 = vector.load %arg3[%c0, %c0_1, %c0_2] : memref<2x4x256xf32, #tpu.memory_space<vmem>>, vector<2x4x256xf32>
    %c0_3 = arith.constant 0 : index
    %c0_4 = arith.constant 0 : index
    %4 = vector.load %arg6[%c0_3, %c0_4] : memref<2x256xf32, #tpu.memory_space<vmem>>, vector<2x256xf32>
    %cst = arith.constant dense<0.000000e+00> : vector<2x256xf32>
    %5 = vector.multi_reduction <add>, %3, %cst [1] : vector<2x4x256xf32> to vector<2x256xf32>
    %6 = arith.addf %4, %5 : vector<2x256xf32>
    %c0_5 = arith.constant 0 : index
    %c0_6 = arith.constant 0 : index
    %7 = vector.load %arg6[%c0_5, %c0_6] : memref<2x256xf32, #tpu.memory_space<vmem>>, vector<2x256xf32>
    tpu.vector_store %arg6[%c0_5, %c0_6], %6 {strides = array<i32>} : memref<2x256xf32, #tpu.memory_space<vmem>>, vector<2x256xf32>,
    %c0_7 = arith.constant 0 : index
    %c0_8 = arith.constant 0 : index
    %8 = vector.load %arg7[%c0_7, %c0_8] : memref<2x256xf32, #tpu.memory_space<vmem>>, vector<2x256xf32>
    %cst_9 = arith.constant dense<0xFF800000> : vector<2x256xf32>
    %9 = vector.multi_reduction <maximumf>, %3, %cst_9 [1] : vector<2x4x256xf32> to vector<2x256xf32>
    %10 = arith.maximumf %8, %9 : vector<2x256xf32>
    %c0_10 = arith.constant 0 : index
    %c0_11 = arith.constant 0 : index
    %11 = vector.load %arg7[%c0_10, %c0_11] : memref<2x256xf32, #tpu.memory_space<vmem>>, vector<2x256xf32>
    tpu.vector_store %arg7[%c0_10, %c0_11], %10 {strides = array<i32>} : memref<2x256xf32, #tpu.memory_space<vmem>>, vector<2x256xf32>,
    %c0_i32_12 = arith.constant 0 : i32
    %12 = arith.cmpi eq, %arg2, %c0_i32_12 : i32
    %13 = arith.extui %12 : i1 to i32
    %c0_i32_13 = arith.constant 0 : i32
    %14 = arith.cmpi ne, %13, %c0_i32_13 : i32
    scf.if %14 {
      %c0_14 = arith.constant 0 : index
      %c0_15 = arith.constant 0 : index
      %15 = vector.load %arg6[%c0_14, %c0_15] : memref<2x256xf32, #tpu.memory_space<vmem>>, vector<2x256xf32>
      %c0_16 = arith.constant 0 : index
      %c0_17 = arith.constant 0 : index
      %16 = vector.load %arg4[%c0_16, %c0_17] : memref<512x256xf32, #tpu.memory_space<vmem>>, vector<256x256xf32>
      %cst_18 = arith.constant dense<0.000000e+00> : vector<2x256xf32>
      %17 = tpu.matmul %15, %16, %cst_18 {dimension_numbers = #tpu.dot_dimension_numbers<[1], [0], [0], [1], [0, 0, 1, 1], [], []>} : vector<2x256xf32>, vector<256x256xf32>, vector<2x256xf32> -> vector<2x256xf32>
      %c0_19 = arith.constant 0 : index
      %c0_20 = arith.constant 0 : index
      %18 = vector.load %arg7[%c0_19, %c0_20] : memref<2x256xf32, #tpu.memory_space<vmem>>, vector<2x256xf32>
      %c256 = arith.constant 256 : index
      %c0_21 = arith.constant 0 : index
      %19 = vector.load %arg4[%c256, %c0_21] : memref<512x256xf32, #tpu.memory_space<vmem>>, vector<256x256xf32>
      %cst_22 = arith.constant dense<0.000000e+00> : vector<2x256xf32>
      %20 = tpu.matmul %18, %19, %cst_22 {dimension_numbers = #tpu.dot_dimension_numbers<[1], [0], [0], [1], [0, 0, 1, 1], [], []>} : vector<2x256xf32>, vector<256x256xf32>, vector<2x256xf32> -> vector<2x256xf32>
      %21 = arith.addf %17, %20 : vector<2x256xf32>
      %22 = arith.negf %21 : vector<2x256xf32>
      %23 = math.exp %22 : vector<2x256xf32>
      %cst_23 = arith.constant 1.000000e+00 : f32
      %24 = vector.broadcast %cst_23 : f32 to vector<2x256xf32>
      %25 = arith.addf %24, %23 : vector<2x256xf32>
      %26 = arith.divf %24, %25 : vector<2x256xf32>
      %c0_24 = arith.constant 0 : index
      %c0_25 = arith.constant 0 : index
      %27 = vector.load %arg5[%c0_24, %c0_25] : memref<2x256xf32, #tpu.memory_space<vmem>>, vector<2x256xf32>
      tpu.vector_store %arg5[%c0_24, %c0_25], %26 {strides = array<i32>} : memref<2x256xf32, #tpu.memory_space<vmem>>, vector<2x256xf32>,
    } else {
    }
    return
  }
  func.func @transform_0(%arg0: i32, %arg1: i32, %arg2: i32) -> (i32, i32, i32) {
    %c0_i32 = arith.constant 0 : i32
    %c0_i32_0 = arith.constant 0 : i32
    return %arg0, %arg2, %c0_i32 : i32, i32, i32
  }
  func.func @transform_1(%arg0: i32, %arg1: i32, %arg2: i32) -> (i32, i32) {
    %c0_i32 = arith.constant 0 : i32
    %c0_i32_0 = arith.constant 0 : i32
    return %c0_i32, %arg1 : i32, i32
  }
  func.func @transform_2(%arg0: i32, %arg1: i32, %arg2: i32) -> (i32, i32) {
    %c0_i32 = arith.constant 0 : i32
    return %arg0, %arg1 : i32, i32
  }
}

</mosaic_0001>

<llo_original>
// kernel: tpu_custom_call.1
$region0: #{tpu_custom_call.1}
  #allocation0 [shape = 'u32[]', space=smem, size = 0x4, offset = 0x4, fixed_abs, tag = 'smem constant byte address 0x4 - core index']
  #allocation1 [shape = 'u32[144,128]{1,0:T(1,128)}', space=vmem, size = 0x12000, scoped, tag = 'internal scratch']
  #allocation2 [shape = 'f32[2,256]{1,0:T(2,128)}', space=vmem, size = 0x800, scoped, tag = 'scratch operand']
  #allocation3 [shape = 'f32[2,256]{1,0:T(2,128)}', space=vmem, size = 0x800, scoped, tag = 'scratch operand']
  %s0 = inlined_call_operand.hbm [shape: f32[2,4,256], index: 0, kind: input, shape index: {}]
  %s1 = inlined_call_operand.hbm [shape: f32[512,256], index: 1, kind: input, shape index: {}]
  %s2 = inlined_call_operand.hbm [shape: f32[2,256], index: 2, kind: output, shape index: {}]
  %s3 = sld [smem:[#allocation0]]
  $region34: #{tpu_custom_call.1} parent=0
    _
  %s5 = ssub.s32 1, %s3
  %s6 = scalar_select 0, %s5, %s3
  $region1: #{tpu_custom_call.1} parent=0
    #allocation4 [shape = 'u8[8192]{0}', space=vmem, size = 0x2000, scoped, tag = 'input window, operand 0, single buffered']
    #allocation5 [shape = 's32[1]{0}', space=sflag, size = 0x4, scoped, tag = 'scoped memory for tpu_custom_call.1']
    #allocation6 [shape = 's32[1]{0}', space=sflag, size = 0x4, scoped, tag = 'scoped memory for tpu_custom_call.1']
    #allocation7 [shape = 'u8[524288]{0}', space=vmem, size = 0x80000, scoped, tag = 'input window, operand 1, single buffered']
    #allocation8 [shape = 's32[1]{0}', space=sflag, size = 0x4, scoped, tag = 'scoped memory for tpu_custom_call.1']
    #allocation9 [shape = 'u8[2048]{0}', space=vmem, size = 0x800, scoped, tag = 'output window, operand 0, single buffered']
    %7 = vsyncpa [#allocation5], 0
    %8 = vsyncpa [#allocation8], 0
    %9 = vsyncpa [#allocation6], 0
    // Predicated region
    $region2: #{tpu_custom_call.1} parent=1 // pred_check
      _
    $region3: #{tpu_custom_call.1} parent=1 // pred_check_branch
      %11 = sbr.rel (0) target = $region5
    $region4: #{tpu_custom_call.1} parent=1 // pred_region
      %s13 = ssub.s32 256, 256
      %14 = vsyncadd [#allocation5], %s13
      %s15 = sshll.u32 [#allocation4], 4
      %s16 = int_to_ptr.vmem [resolvable:$true] %s15
      %21 = dma.hbm_to_vmem [thread:$0]  %s0, 256, %s16, [#allocation5], 128, 128, 8
    $region5: #{tpu_custom_call.1} parent=1 // pred_fallthru
      _
    // Predicated region
    $region6: #{tpu_custom_call.1} parent=1 // pred_check
      _
    $region7: #{tpu_custom_call.1} parent=1 // pred_check_branch
      %23 = sbr.rel (0) target = $region9
    $region8: #{tpu_custom_call.1} parent=1 // pred_region
      %s25 = ssub.s32 16384, 16384
      %26 = vsyncadd [#allocation8], %s25
      %s27 = sshll.u32 [#allocation7], 4
      %s28 = int_to_ptr.vmem [resolvable:$true] %s27
      %33 = dma.hbm_to_vmem [thread:$0]  %s1, 16384, %s28, [#allocation8], 256, 256, 16
    $region9: #{tpu_custom_call.1} parent=1 // pred_fallthru
      _
    // Predicated region
    $region10: #{tpu_custom_call.1} parent=1 // pred_check
      _
    $region11: #{tpu_custom_call.1} parent=1 // pred_check_branch
      %35 = sbr.rel (0) target = $region13
    $region12: #{tpu_custom_call.1} parent=1 // pred_region
      %36 = dma.done [#allocation5], 256
    $region13: #{tpu_custom_call.1} parent=1 // pred_fallthru
      _
    // Predicated region
    $region14: #{tpu_custom_call.1} parent=1 // pred_check
      _
    $region15: #{tpu_custom_call.1} parent=1 // pred_check_branch
      %38 = sbr.rel (0) target = $region17
    $region16: #{tpu_custom_call.1} parent=1 // pred_region
      %39 = dma.done [#allocation8], 16384
    $region17: #{tpu_custom_call.1} parent=1 // pred_fallthru
      _
    %p40 = scmp.eq.s32.totalorder 0, 0
    // Predicated region
    $region18: #{tpu_custom_call.1} parent=1 // pred_check
      %p41 = pneg %p40
    $region19: #{tpu_custom_call.1} parent=1 // pred_check_branch
      %43 = sbr.rel (%p41) target = $region21
    $region20: #{tpu_custom_call.1} parent=1 // pred_region
      %44 = vst [vmem:[#allocation2] sm:$0xf] 0.0
      %45 = vst [vmem:[#allocation3] sm:$0xf] -inf
    $region21: #{tpu_custom_call.1} parent=1 // pred_fallthru
      _
    %v46 = vld [vmem:[#allocation4] sm:$0xff]
    %v47 = vld [vmem:[#allocation4 + $0x8] sm:$0xff]
    %v48 = vld [vmem:[#allocation2] sm:$0xf]
    %v51 = vcombine.high %v46, %v46
    %v52 = vcombine.high %v47, %v47
    %vm55 = vcmask 1043456
    %v56 = vsel %vm55, %v46, 0.0
    %v57 = vrot.slane %v56, 4
    %v58 = vadd.f32 %v56, %v57
    %v59 = vrot.slane %v58, 2
    %v60 = vadd.f32 %v58, %v59
    %v61 = vrot.slane %v60, 1
    %v62 = vadd.f32 %v60, %v61
    %v63 = vsel %vm55, %v51, 0.0
    %v64 = vrot.slane %v63, 4
    %v65 = vadd.f32 %v63, %v64
    %v66 = vrot.slane %v65, 2
    %v67 = vadd.f32 %v65, %v66
    %v68 = vrot.slane %v67, 1
    %v69 = vadd.f32 %v67, %v68
    %v70 = vsel %vm55, %v47, 0.0
    %v71 = vrot.slane %v70, 4
    %v72 = vadd.f32 %v70, %v71
    %v73 = vrot.slane %v72, 2
    %v74 = vadd.f32 %v72, %v73
    %v75 = vrot.slane %v74, 1
    %v76 = vadd.f32 %v74, %v75
    %v77 = vsel %vm55, %v52, 0.0
    %v78 = vrot.slane %v77, 4
    %v79 = vadd.f32 %v77, %v78
    %v80 = vrot.slane %v79, 2
    %v81 = vadd.f32 %v79, %v80
    %v82 = vrot.slane %v81, 1
    %v83 = vadd.f32 %v81, %v82
    %v88 = vcombine.low %v62, %v69
    %v90 = vunpack.c.l.s4 1983009808
    %v91 = vunpack.c.0.s8 %v90
    %v92 = vlaneseq
    %v93 = vshrl.u32 %v92, 7
    %v94 = vsub.s32 %v91, %v93
    %v95 = vrot.slane %v88, %v94
    %v96 = vcombine.low %v76, %v83
    %v98 = vunpack.c.l.s4 1983009808
    %v99 = vunpack.c.0.s8 %v98
    %v100 = vlaneseq
    %v101 = vshrl.u32 %v100, 7
    %v102 = vsub.s32 %v99, %v101
    %v103 = vrot.slane %v96, %v102
    %vm104 = vcmask 1044484
    %v105 = vsel %vm104, %v95, %v95
    %vm106 = vcmask 1046534
    %v107 = vsel %vm106, %v95, %v105
    %v108 = vrot.slane %v103, 7
    %vm109 = vcmask 1041409
    %v110 = vsel %vm109, %v108, %v107
    %vm111 = vcmask 1043459
    %v112 = vsel %vm111, %v108, %v110
    %vm113 = vcmask 1045509
    %v114 = vsel %vm113, %v108, %v112
    %vm115 = vcmask 1047559
    %v116 = vsel %vm115, %v108, %v114
    %v118 = vadd.f32 %v48, %v116
    %119 = vst [vmem:[#allocation2] sm:$0xf] %v118
    %v120 = vld [vmem:[#allocation3] sm:$0xf]
    %v121 = vsel %vm55, %v46, -inf
    %v122 = vrot.slane %v121, 4
    %v123 = vmax.f32 %v121, %v122
    %v124 = vrot.slane %v123, 2
    %v125 = vmax.f32 %v123, %v124
    %v126 = vrot.slane %v125, 1
    %v127 = vmax.f32 %v125, %v126
    %v128 = vsel %vm55, %v51, -inf
    %v129 = vrot.slane %v128, 4
    %v130 = vmax.f32 %v128, %v129
    %v131 = vrot.slane %v130, 2
    %v132 = vmax.f32 %v130, %v131
    %v133 = vrot.slane %v132, 1
    %v134 = vmax.f32 %v132, %v133
    %v135 = vsel %vm55, %v47, -inf
    %v136 = vrot.slane %v135, 4
    %v137 = vmax.f32 %v135, %v136
    %v138 = vrot.slane %v137, 2
    %v139 = vmax.f32 %v137, %v138
    %v140 = vrot.slane %v139, 1
    %v141 = vmax.f32 %v139, %v140
    %v142 = vsel %vm55, %v52, -inf
    %v143 = vrot.slane %v142, 4
    %v144 = vmax.f32 %v142, %v143
    %v145 = vrot.slane %v144, 2
    %v146 = vmax.f32 %v144, %v145
    %v147 = vrot.slane %v146, 1
    %v148 = vmax.f32 %v146, %v147
    %v153 = vcombine.low %v127, %v134
    %v155 = vunpack.c.l.s4 1983009808
    %v156 = vunpack.c.0.s8 %v155
    %v157 = vlaneseq
    %v158 = vshrl.u32 %v157, 7
    %v159 = vsub.s32 %v156, %v158
    %v160 = vrot.slane %v153, %v159
    %v161 = vcombine.low %v141, %v148
    %v163 = vunpack.c.l.s4 1983009808
    %v164 = vunpack.c.0.s8 %v163
    %v165 = vlaneseq
    %v166 = vshrl.u32 %v165, 7
    %v167 = vsub.s32 %v164, %v166
    %v168 = vrot.slane %v161, %v167
    %v169 = vsel %vm104, %v160, %v160
    %v170 = vsel %vm106, %v160, %v169
    %v171 = vrot.slane %v168, 7
    %v172 = vsel %vm109, %v171, %v170
    %v173 = vsel %vm111, %v171, %v172
    %v174 = vsel %vm113, %v171, %v173
    %v175 = vsel %vm115, %v171, %v174
    %v177 = vmax.f32 %v120, %v175
    %178 = vst [vmem:[#allocation3] sm:$0xf] %v177
    // Predicated region
    $region22: #{tpu_custom_call.1} parent=1 // pred_check
      %p179 = pneg %p40
    $region23: #{tpu_custom_call.1} parent=1 // pred_check_branch
      %181 = sbr.rel (%p179) target = $region25
    $region24: #{tpu_custom_call.1} parent=1 // pred_region
      %v182 = vld [vmem:[#allocation2] sm:$0xf]
      %v183 = vld [vmem:[#allocation7] sm:$0xff]
      %v184 = vld [vmem:[#allocation7 + $0x8] sm:$0xff]
      %v185 = vld [vmem:[#allocation7 + $0x10] sm:$0xff]
      %v186 = vld [vmem:[#allocation7 + $0x18] sm:$0xff]
      %v187 = vld [vmem:[#allocation7 + $0x20] sm:$0xff]
      %v188 = vld [vmem:[#allocation7 + $0x28] sm:$0xff]
      %v189 = vld [vmem:[#allocation7 + $0x30] sm:$0xff]
      %v190 = vld [vmem:[#allocation7 + $0x38] sm:$0xff]
      %v191 = vld [vmem:[#allocation7 + $0x40] sm:$0xff]
      %v192 = vld [vmem:[#allocation7 + $0x48] sm:$0xff]
      %v193 = vld [vmem:[#allocation7 + $0x50] sm:$0xff]
      %v194 = vld [vmem:[#allocation7 + $0x58] sm:$0xff]
      %v195 = vld [vmem:[#allocation7 + $0x60] sm:$0xff]
      %v196 = vld [vmem:[#allocation7 + $0x68] sm:$0xff]
      %v197 = vld [vmem:[#allocation7 + $0x70] sm:$0xff]
      %v198 = vld [vmem:[#allocation7 + $0x78] sm:$0xff]
      %v199 = vld [vmem:[#allocation7 + $0x80] sm:$0xff]
      %v200 = vld [vmem:[#allocation7 + $0x88] sm:$0xff]
      %v201 = vld [vmem:[#allocation7 + $0x90] sm:$0xff]
      %v202 = vld [vmem:[#allocation7 + $0x98] sm:$0xff]
      %v203 = vld [vmem:[#allocation7 + $0xa0] sm:$0xff]
      %v204 = vld [vmem:[#allocation7 + $0xa8] sm:$0xff]
      %v205 = vld [vmem:[#allocation7 + $0xb0] sm:$0xff]
      %v206 = vld [vmem:[#allocation7 + $0xb8] sm:$0xff]
      %v207 = vld [vmem:[#allocation7 + $0xc0] sm:$0xff]
      %v208 = vld [vmem:[#allocation7 + $0xc8] sm:$0xff]
      %v209 = vld [vmem:[#allocation7 + $0xd0] sm:$0xff]
      %v210 = vld [vmem:[#allocation7 + $0xd8] sm:$0xff]
      %v211 = vld [vmem:[#allocation7 + $0xe0] sm:$0xff]
      %v212 = vld [vmem:[#allocation7 + $0xe8] sm:$0xff]
      %v213 = vld [vmem:[#allocation7 + $0xf0] sm:$0xff]
      %v214 = vld [vmem:[#allocation7 + $0xf8] sm:$0xff]
      %v215 = vld [vmem:[#allocation7 + $0x100] sm:$0xff]
      %v216 = vld [vmem:[#allocation7 + $0x108] sm:$0xff]
      %v217 = vld [vmem:[#allocation7 + $0x110] sm:$0xff]
      %v218 = vld [vmem:[#allocation7 + $0x118] sm:$0xff]
      %v219 = vld [vmem:[#allocation7 + $0x120] sm:$0xff]
      %v220 = vld [vmem:[#allocation7 + $0x128] sm:$0xff]
      %v221 = vld [vmem:[#allocation7 + $0x130] sm:$0xff]
      %v222 = vld [vmem:[#allocation7 + $0x138] sm:$0xff]
      %v223 = vld [vmem:[#allocation7 + $0x140] sm:$0xff]
      %v224 = vld [vmem:[#allocation7 + $0x148] sm:$0xff]
      %v225 = vld [vmem:[#allocation7 + $0x150] sm:$0xff]
      %v226 = vld [vmem:[#allocation7 + $0x158] sm:$0xff]
      %v227 = vld [vmem:[#allocation7 + $0x160] sm:$0xff]
      %v228 = vld [vmem:[#allocation7 + $0x168] sm:$0xff]
      %v229 = vld [vmem:[#allocation7 + $0x170] sm:$0xff]
      %v230 = vld [vmem:[#allocation7 + $0x178] sm:$0xff]
      %v231 = vld [vmem:[#allocation7 + $0x180] sm:$0xff]
      %v232 = vld [vmem:[#allocation7 + $0x188] sm:$0xff]
      %v233 = vld [vmem:[#allocation7 + $0x190] sm:$0xff]
      %v234 = vld [vmem:[#allocation7 + $0x198] sm:$0xff]
      %v235 = vld [vmem:[#allocation7 + $0x1a0] sm:$0xff]
      %v236 = vld [vmem:[#allocation7 + $0x1a8] sm:$0xff]
      %v237 = vld [vmem:[#allocation7 + $0x1b0] sm:$0xff]
      %v238 = vld [vmem:[#allocation7 + $0x1b8] sm:$0xff]
      %v239 = vld [vmem:[#allocation7 + $0x1c0] sm:$0xff]
      %v240 = vld [vmem:[#allocation7 + $0x1c8] sm:$0xff]
      %v241 = vld [vmem:[#allocation7 + $0x1d0] sm:$0xff]
      %v242 = vld [vmem:[#allocation7 + $0x1d8] sm:$0xff]
      %v243 = vld [vmem:[#allocation7 + $0x1e0] sm:$0xff]
      %v244 = vld [vmem:[#allocation7 + $0x1e8] sm:$0xff]
      %v245 = vld [vmem:[#allocation7 + $0x1f0] sm:$0xff]
      %v246 = vld [vmem:[#allocation7 + $0x1f8] sm:$0xff]
      %v247 = vld [vmem:[#allocation3] sm:$0xf]
      %v248 = vld [vmem:[#allocation7 + $0x200] sm:$0xff]
      %v249 = vld [vmem:[#allocation7 + $0x208] sm:$0xff]
      %v250 = vld [vmem:[#allocation7 + $0x210] sm:$0xff]
      %v251 = vld [vmem:[#allocation7 + $0x218] sm:$0xff]
      %v252 = vld [vmem:[#allocation7 + $0x220] sm:$0xff]
      %v253 = vld [vmem:[#allocation7 + $0x228] sm:$0xff]
      %v254 = vld [vmem:[#allocation7 + $0x230] sm:$0xff]
      %v255 = vld [vmem:[#allocation7 + $0x238] sm:$0xff]
      %v256 = vld [vmem:[#allocation7 + $0x240] sm:$0xff]
      %v257 = vld [vmem:[#allocation7 + $0x248] sm:$0xff]
      %v258 = vld [vmem:[#allocation7 + $0x250] sm:$0xff]
      %v259 = vld [vmem:[#allocation7 + $0x258] sm:$0xff]
      %v260 = vld [vmem:[#allocation7 + $0x260] sm:$0xff]
      %v261 = vld [vmem:[#allocation7 + $0x268] sm:$0xff]
      %v262 = vld [vmem:[#allocation7 + $0x270] sm:$0xff]
      %v263 = vld [vmem:[#allocation7 + $0x278] sm:$0xff]
      %v264 = vld [vmem:[#allocation7 + $0x280] sm:$0xff]
      %v265 = vld [vmem:[#allocation7 + $0x288] sm:$0xff]
      %v266 = vld [vmem:[#allocation7 + $0x290] sm:$0xff]
      %v267 = vld [vmem:[#allocation7 + $0x298] sm:$0xff]
      %v268 = vld [vmem:[#allocation7 + $0x2a0] sm:$0xff]
      %v269 = vld [vmem:[#allocation7 + $0x2a8] sm:$0xff]
      %v270 = vld [vmem:[#allocation7 + $0x2b0] sm:$0xff]
      %v271 = vld [vmem:[#allocation7 + $0x2b8] sm:$0xff]
      %v272 = vld [vmem:[#allocation7 + $0x2c0] sm:$0xff]
      %v273 = vld [vmem:[#allocation7 + $0x2c8] sm:$0xff]
      %v274 = vld [vmem:[#allocation7 + $0x2d0] sm:$0xff]
      %v275 = vld [vmem:[#allocation7 + $0x2d8] sm:$0xff]
      %v276 = vld [vmem:[#allocation7 + $0x2e0] sm:$0xff]
      %v277 = vld [vmem:[#allocation7 + $0x2e8] sm:$0xff]
      %v278 = vld [vmem:[#allocation7 + $0x2f0] sm:$0xff]
      %v279 = vld [vmem:[#allocation7 + $0x2f8] sm:$0xff]
      %v280 = vld [vmem:[#allocation7 + $0x300] sm:$0xff]
      %v281 = vld [vmem:[#allocation7 + $0x308] sm:$0xff]
      %v282 = vld [vmem:[#allocation7 + $0x310] sm:$0xff]
      %v283 = vld [vmem:[#allocation7 + $0x318] sm:$0xff]
      %v284 = vld [vmem:[#allocation7 + $0x320] sm:$0xff]
      %v285 = vld [vmem:[#allocation7 + $0x328] sm:$0xff]
      %v286 = vld [vmem:[#allocation7 + $0x330] sm:$0xff]
      %v287 = vld [vmem:[#allocation7 + $0x338] sm:$0xff]
      %v288 = vld [vmem:[#allocation7 + $0x340] sm:$0xff]
      %v289 = vld [vmem:[#allocation7 + $0x348] sm:$0xff]
      %v290 = vld [vmem:[#allocation7 + $0x350] sm:$0xff]
      %v291 = vld [vmem:[#allocation7 + $0x358] sm:$0xff]
      %v292 = vld [vmem:[#allocation7 + $0x360] sm:$0xff]
      %v293 = vld [vmem:[#allocation7 + $0x368] sm:$0xff]
      %v294 = vld [vmem:[#allocation7 + $0x370] sm:$0xff]
      %v295 = vld [vmem:[#allocation7 + $0x378] sm:$0xff]
      %v296 = vld [vmem:[#allocation7 + $0x380] sm:$0xff]
      %v297 = vld [vmem:[#allocation7 + $0x388] sm:$0xff]
      %v298 = vld [vmem:[#allocation7 + $0x390] sm:$0xff]
      %v299 = vld [vmem:[#allocation7 + $0x398] sm:$0xff]
      %v300 = vld [vmem:[#allocation7 + $0x3a0] sm:$0xff]
      %v301 = vld [vmem:[#allocation7 + $0x3a8] sm:$0xff]
      %v302 = vld [vmem:[#allocation7 + $0x3b0] sm:$0xff]
      %v303 = vld [vmem:[#allocation7 + $0x3b8] sm:$0xff]
      %v304 = vld [vmem:[#allocation7 + $0x3c0] sm:$0xff]
      %v305 = vld [vmem:[#allocation7 + $0x3c8] sm:$0xff]
      %v306 = vld [vmem:[#allocation7 + $0x3d0] sm:$0xff]
      %v307 = vld [vmem:[#allocation7 + $0x3d8] sm:$0xff]
      %v308 = vld [vmem:[#allocation7 + $0x3e0] sm:$0xff]
      %v309 = vld [vmem:[#allocation7 + $0x3e8] sm:$0xff]
      %v310 = vld [vmem:[#allocation7 + $0x3f0] sm:$0xff]
      %v311 = vld [vmem:[#allocation7 + $0x3f8] sm:$0xff]
      %v314 = vunpack.c.l.s4 1983009808
      %v315 = vunpack.c.0.s8 %v314
      %v316 = vlaneseq
      %v317 = vshrl.u32 %v316, 7
      %v318 = vsub.s32 %v315, %v317
      %v319 = vrot.slane %v247, %v318
      %v320 = vcombine.high %v319, %v319
      %323 = vmatprep.subr.mxu0 %v249
      %324 = vmatpush1.msra.mxu0 %v248
      %325 = vmatprep.subr.mxu0 %v251
      %326 = vmatpush1.msra.mxu0 %v250
      %327 = vmatprep.subr.mxu0 %v253
      %328 = vmatpush1.msra.mxu0 %v252
      %329 = vmatprep.subr.mxu0 %v255
      %330 = vmatpush1.msra.mxu0 %v254
      %331 = vmatprep.subr.mxu0 %v257
      %332 = vmatpush1.msra.mxu0 %v256
      %333 = vmatprep.subr.mxu0 %v259
      %334 = vmatpush1.msra.mxu0 %v258
      %335 = vmatprep.subr.mxu0 %v261
      %336 = vmatpush1.msra.mxu0 %v260
      %337 = vmatprep.subr.mxu0 %v263
      %338 = vmatpush1.msra.mxu0 %v262
      %339 = vmatprep.subr.mxu0 %v265
      %340 = vmatpush1.msra.mxu0 %v264
      %341 = vmatprep.subr.mxu0 %v267
      %342 = vmatpush1.msra.mxu0 %v266
      %343 = vmatprep.subr.mxu0 %v269
      %344 = vmatpush1.msra.mxu0 %v268
      %345 = vmatprep.subr.mxu0 %v271
      %346 = vmatpush1.msra.mxu0 %v270
      %347 = vmatprep.subr.mxu0 %v273
      %348 = vmatpush1.msra.mxu0 %v272
      %349 = vmatprep.subr.mxu0 %v275
      %350 = vmatpush1.msra.mxu0 %v274
      %351 = vmatprep.subr.mxu0 %v277
      %352 = vmatpush1.msra.mxu0 %v276
      %353 = vmatprep.subr.mxu0 %v279
      %354 = vmatpush1.msra.mxu0 %v278
      %355 = vmatprep.subr.mxu0 %v281
      %356 = vmatpush1.msra.mxu0 %v280
      %357 = vmatprep.subr.mxu0 %v283
      %358 = vmatpush1.msra.mxu0 %v282
      %359 = vmatprep.subr.mxu0 %v285
      %360 = vmatpush1.msra.mxu0 %v284
      %361 = vmatprep.subr.mxu0 %v287
      %362 = vmatpush1.msra.mxu0 %v286
      %363 = vmatprep.subr.mxu0 %v289
      %364 = vmatpush1.msra.mxu0 %v288
      %365 = vmatprep.subr.mxu0 %v291
      %366 = vmatpush1.msra.mxu0 %v290
      %367 = vmatprep.subr.mxu0 %v293
      %368 = vmatpush1.msra.mxu0 %v292
      %369 = vmatprep.subr.mxu0 %v295
      %370 = vmatpush1.msra.mxu0 %v294
      %371 = vmatprep.subr.mxu0 %v297
      %372 = vmatpush1.msra.mxu0 %v296
      %373 = vmatprep.subr.mxu0 %v299
      %374 = vmatpush1.msra.mxu0 %v298
      %375 = vmatprep.subr.mxu0 %v301
      %376 = vmatpush1.msra.mxu0 %v300
      %377 = vmatprep.subr.mxu0 %v303
      %378 = vmatpush1.msra.mxu0 %v302
      %379 = vmatprep.subr.mxu0 %v305
      %380 = vmatpush1.msra.mxu0 %v304
      %381 = vmatprep.subr.mxu0 %v307
      %382 = vmatpush1.msra.mxu0 %v306
      %383 = vmatprep.subr.mxu0 %v309
      %384 = vmatpush1.msra.mxu0 %v308
      %385 = vmatprep.subr.mxu0 %v311
      %386 = vmatpush1.msra.mxu0 %v310
      %387 = vmatprep.mubr.f32.mxu0 %v320
      %388 = vmatmul.mubr.f32.gmra.mrb[0].mxu0 %v319
      %v389 = vpop.f32.mrb[0].mxu0
      %v390 = vadd.f32 0.0, %v389
      %v391 = vpop.f32.mrb[0].mxu0
      %v392 = vadd.f32 0.0, %v391
      %393 = vdwg.mxu0
      %v396 = vunpack.c.l.s4 1983009808
      %v397 = vunpack.c.0.s8 %v396
      %v398 = vlaneseq
      %v399 = vshrl.u32 %v398, 7
      %v400 = vsub.s32 %v397, %v399
      %v401 = vrot.slane %v182, %v400
      %v402 = vcombine.high %v401, %v401
      %405 = vmatprep.subr.mxu0 %v184
      %406 = vmatpush1.msra.mxu0 %v183
      %407 = vmatprep.subr.mxu0 %v186
      %408 = vmatpush1.msra.mxu0 %v185
      %409 = vmatprep.subr.mxu0 %v188
      %410 = vmatpush1.msra.mxu0 %v187
      %411 = vmatprep.subr.mxu0 %v190
      %412 = vmatpush1.msra.mxu0 %v189
      %413 = vmatprep.subr.mxu0 %v192
      %414 = vmatpush1.msra.mxu0 %v191
      %415 = vmatprep.subr.mxu0 %v194
      %416 = vmatpush1.msra.mxu0 %v193
      %417 = vmatprep.subr.mxu0 %v196
      %418 = vmatpush1.msra.mxu0 %v195
      %419 = vmatprep.subr.mxu0 %v198
      %420 = vmatpush1.msra.mxu0 %v197
      %421 = vmatprep.subr.mxu0 %v200
      %422 = vmatpush1.msra.mxu0 %v199
      %423 = vmatprep.subr.mxu0 %v202
      %424 = vmatpush1.msra.mxu0 %v201
      %425 = vmatprep.subr.mxu0 %v204
      %426 = vmatpush1.msra.mxu0 %v203
      %427 = vmatprep.subr.mxu0 %v206
      %428 = vmatpush1.msra.mxu0 %v205
      %429 = vmatprep.subr.mxu0 %v208
      %430 = vmatpush1.msra.mxu0 %v207
      %431 = vmatprep.subr.mxu0 %v210
      %432 = vmatpush1.msra.mxu0 %v209
      %433 = vmatprep.subr.mxu0 %v212
      %434 = vmatpush1.msra.mxu0 %v211
      %435 = vmatprep.subr.mxu0 %v214
      %436 = vmatpush1.msra.mxu0 %v213
      %437 = vmatprep.subr.mxu0 %v216
      %438 = vmatpush1.msra.mxu0 %v215
      %439 = vmatprep.subr.mxu0 %v218
      %440 = vmatpush1.msra.mxu0 %v217
      %441 = vmatprep.subr.mxu0 %v220
      %442 = vmatpush1.msra.mxu0 %v219
      %443 = vmatprep.subr.mxu0 %v222
      %444 = vmatpush1.msra.mxu0 %v221
      %445 = vmatprep.subr.mxu0 %v224
      %446 = vmatpush1.msra.mxu0 %v223
      %447 = vmatprep.subr.mxu0 %v226
      %448 = vmatpush1.msra.mxu0 %v225
      %449 = vmatprep.subr.mxu0 %v228
      %450 = vmatpush1.msra.mxu0 %v227
      %451 = vmatprep.subr.mxu0 %v230
      %452 = vmatpush1.msra.mxu0 %v229
      %453 = vmatprep.subr.mxu0 %v232
      %454 = vmatpush1.msra.mxu0 %v231
      %455 = vmatprep.subr.mxu0 %v234
      %456 = vmatpush1.msra.mxu0 %v233
      %457 = vmatprep.subr.mxu0 %v236
      %458 = vmatpush1.msra.mxu0 %v235
      %459 = vmatprep.subr.mxu0 %v238
      %460 = vmatpush1.msra.mxu0 %v237
      %461 = vmatprep.subr.mxu0 %v240
      %462 = vmatpush1.msra.mxu0 %v239
      %463 = vmatprep.subr.mxu0 %v242
      %464 = vmatpush1.msra.mxu0 %v241
      %465 = vmatprep.subr.mxu0 %v244
      %466 = vmatpush1.msra.mxu0 %v243
      %467 = vmatprep.subr.mxu0 %v246
      %468 = vmatpush1.msra.mxu0 %v245
      %469 = vmatprep.mubr.f32.mxu0 %v402
      %470 = vmatmul.mubr.f32.gmra.mrb[0].mxu0 %v401
      %v471 = vpop.f32.mrb[0].mxu0
      %v472 = vadd.f32 %v390, %v471
      %v473 = vpop.f32.mrb[0].mxu0
      %v474 = vadd.f32 %v392, %v473
      %475 = vdwg.mxu0
      %v476 = vxor.u32 %v472, 2147483648
      %v477 = vxor.u32 %v474, 2147483648
      %v478 = vmul.f32 %v476, 1.442695
      %v479 = vpow.pop %v478
      %v480 = vmul.f32 %v477, 1.442695
      %v481 = vpow.pop %v480
      %v482 = vadd.f32 %v479, 1.0
      %v483 = vadd.f32 %v481, 1.0
      %v484 = vrcp.pop %v482
      %v485 = vmul.f32 1.0, %v484
      %v486 = vrcp.pop %v483
      %v487 = vmul.f32 1.0, %v486
      %v490 = vcombine.low %v485, %v487
      %v492 = vunpack.c.l.s4 1983009808
      %v493 = vunpack.c.0.s8 %v492
      %v494 = vlaneseq
      %v495 = vshrl.u32 %v494, 7
      %v496 = vsub.s32 %v493, %v495
      %v497 = vrot.slane %v490, %v496
      %499 = vst [vmem:[#allocation9] sm:$0xf] %v497
    $region25: #{tpu_custom_call.1} parent=1 // pred_fallthru
      _
    // Predicated region
    $region26: #{tpu_custom_call.1} parent=1 // pred_check
      _
    $region27: #{tpu_custom_call.1} parent=1 // pred_check_branch
      %501 = sbr.rel (0) target = $region29
    $region28: #{tpu_custom_call.1} parent=1 // pred_region
      %s503 = ssub.s32 64, 64
      %504 = vsyncadd [#allocation6], %s503
      %s506 = sshll.u32 [#allocation9], 4
      %s507 = int_to_ptr.vmem [resolvable:$true] %s506
      %509 = dma.vmem_to_hbm [thread:$0]  %s507, 64, %s2, [#allocation6]
    $region29: #{tpu_custom_call.1} parent=1 // pred_fallthru
      _
    // Predicated region
    $region30: #{tpu_custom_call.1} parent=1 // pred_check
      _
    $region31: #{tpu_custom_call.1} parent=1 // pred_check_branch
      %511 = sbr.rel (0) target = $region33
    $region32: #{tpu_custom_call.1} parent=1 // pred_region
      %512 = dma.done [#allocation6], 64
    $region33: #{tpu_custom_call.1} parent=1 // pred_fallthru
      _
    %513 = vsyncpa [#allocation5], 1
    %514 = vsyncpa [#allocation8], 1
    %515 = vsyncpa [#allocation6], 1

</llo_original>
